<compile_context>
chip_gen: v6e
topology: v6e:2x2x1
jax: 0.10.0
libtpu: 0.0.40
codegen_flags: <defaults>
</compile_context>

<pallas_src>
import functools

import jax
import jax.numpy as jnp
from jax.experimental import pallas as pl
from jax.experimental.pallas import tpu as pltpu


def _round_up(x: int, m: int) -> int:
    return ((x + m - 1) // m) * m


# ----------------------------------------------------------------------------
# Fused kernel: hidden MLP stack (Linear + folded-BN + ReLU) + 3 ZINB heads
# ----------------------------------------------------------------------------
def _make_fused_kernel(num_hidden: int, g_pad: int):
    """Ref order: x, (w_i, b_i) * num_hidden, w_heads, b_heads, pi, theta, mu."""

    def kernel(*refs):
        x_ref = refs[0]
        h = x_ref[...]
        idx = 1
        for _ in range(num_hidden):
            w_ref, b_ref = refs[idx], refs[idx + 1]
            idx += 2
            h = jnp.dot(h, w_ref[...], preferred_element_type=jnp.float32)
            h = jnp.maximum(h + b_ref[...], 0.0)
            # TODO(synk): Dropout omitted (identity) — eval-mode semantics.
            # Training-mode dropout would use pltpu.prng_seed + prng_random_bits.

        wh_ref, bh_ref = refs[idx], refs[idx + 1]
        pi_ref, theta_ref, mu_ref = refs[idx + 2], refs[idx + 3], refs[idx + 4]

        # Single MXU pass over all three heads (lane-dense 3*g_pad output slab).
        logits = jnp.dot(h, wh_ref[...], preferred_element_type=jnp.float32)
        logits = logits + bh_ref[...]

        g = g_pad
        lpi = logits[:, :g]
        ld = logits[:, g:2 * g]
        lm = logits[:, 2 * g:3 * g]

        # pi = sigmoid(lpi) == 0.5*(tanh(lpi/2)+1): exact, EUP tanh, no divide.
        pi_ref[...] = 0.5 * (jnp.tanh(0.5 * lpi) + 1.0)

        # theta = clamp(softplus(ld), 1e-4, 1e4); PyTorch softplus threshold=20.
        sp = jnp.where(ld > 20.0, ld, jnp.log1p(jnp.exp(jnp.minimum(ld, 20.0))))
        theta_ref[...] = jnp.clip(sp, 1e-4, 1e4)

        # mu = clamp(exp(lm), 1e-5, 1e6)
        mu_ref[...] = jnp.clip(jnp.exp(lm), 1e-5, 1e6)

    return kernel


# ----------------------------------------------------------------------------
# Forward wrapper: fold BN, concat+pad heads, pad/tile batch, one pallas_call
# ----------------------------------------------------------------------------
@functools.partial(jax.jit, static_argnames=("block_n",))
def zinb_decoder_forward(params, z, block_n=256):
    eps = 1e-5

    # Fold BatchNorm1d (running stats) into the preceding Linear.
    folded = []
    for layer in params["hidden"]:
        scale = layer["gamma"] / jnp.sqrt(layer["running_var"] + eps)   # (1, H)
        shift = layer["beta"] - layer["running_mean"] * scale           # (1, H)
        folded.append((layer["w"] * scale, layer["b"] * scale + shift))

    n, in_dim = z.shape
    g = params["pi"]["w"].shape[1]
    g_pad = _round_up(g, 128)            # lane-dense head / output width

    def _pad_head(w, b):
        if g_pad != g:
            w = jnp.pad(w, ((0, 0), (0, g_pad - g)))
            b = jnp.pad(b, ((0, 0), (0, g_pad - g)))
        return w, b

    heads = [_pad_head(params[name]["w"], params[name]["b"])
             for name in ("pi", "disp", "mean")]
    w_heads = jnp.concatenate([w for w, _ in heads], axis=1)   # (H, 3*g_pad)
    b_heads = jnp.concatenate([b for _, b in heads], axis=1)   # (1, 3*g_pad)

    # Batch tile: multiple of 8 sublanes, capped at block_n; pad N up to a tile.
    bn = min(block_n, _round_up(n, 8))
    n_pad = _round_up(n, bn)
    z_pad = z if n_pad == n else jnp.pad(z, ((0, n_pad - n), (0, 0)))

    flat_params = []
    for w, b in folded:
        flat_params += [w, b]
    flat_params += [w_heads, b_heads]

    def _const_spec(a):
        # Whole-array block, same block every grid step (loaded once, resident).
        nd = a.ndim
        return pl.BlockSpec(a.shape, lambda i, _nd=nd: (0,) * _nd)

    in_specs = [pl.BlockSpec((bn, in_dim), lambda i: (i, 0))]
    in_specs += [_const_spec(a) for a in flat_params]

    out_shape = jax.ShapeDtypeStruct((n_pad, g_pad), jnp.float32)
    out_spec = pl.BlockSpec((bn, g_pad), lambda i: (i, 0))

    # Advisory cost estimate (all shapes are static Python ints at trace time).
    flops = 0
    prev = in_dim
    for w, _ in folded:
        flops += 2 * n_pad * prev * w.shape[1]
        prev = w.shape[1]
    flops += 2 * n_pad * prev * 3 * g_pad
    bytes_accessed = 4 * (z_pad.size + sum(int(a.size) for a in flat_params)
                          + 3 * n_pad * g_pad)
    cost = pl.CostEstimate(flops=flops,
                           transcendentals=4 * n_pad * g_pad,
                           bytes_accessed=bytes_accessed)

    kernel = _make_fused_kernel(len(folded), g_pad)
    pi, theta, mu = pl.pallas_call(
        kernel,
        grid=(n_pad // bn,),
        in_specs=in_specs,
        out_specs=(out_spec, out_spec, out_spec),
        out_shape=(out_shape, out_shape, out_shape),
        compiler_params=pltpu.CompilerParams(
            dimension_semantics=("parallel",)),
        cost_estimate=cost,
    )(z_pad, *flat_params)

    # Slice away batch / gene padding (no-op when shapes were already aligned).
    return pi[:n, :g], theta[:n, :g], mu[:n, :g]


# ----------------------------------------------------------------------------
# Parameter construction (shapes follow the nn.Module; BN defaults)
# ----------------------------------------------------------------------------
def init_zinb_decoder(key, in_dim, hidden_dims, n_genes):
    params = {"hidden": []}
    prev = in_dim
    for h in hidden_dims:
        key, kw, kb = jax.random.split(key, 3)
        lim = 1.0 / jnp.sqrt(prev)
        params["hidden"].append({
            "w": jax.random.uniform(kw, (prev, h), jnp.float32, -lim, lim),
            "b": jax.random.uniform(kb, (1, h), jnp.float32, -lim, lim),
            # BatchNorm1d defaults: gamma=1, beta=0, running_mean=0, running_var=1
            "gamma": jnp.ones((1, h), jnp.float32),
            "beta": jnp.zeros((1, h), jnp.float32),
            "running_mean": jnp.zeros((1, h), jnp.float32),
            "running_var": jnp.ones((1, h), jnp.float32),
        })
        prev = h
    for name in ("pi", "disp", "mean"):
        key, kw, kb = jax.random.split(key, 3)
        lim = 1.0 / jnp.sqrt(prev)
        params[name] = {
            "w": jax.random.uniform(kw, (prev, n_genes), jnp.float32, -lim, lim),
            "b": jax.random.uniform(kb, (1, n_genes), jnp.float32, -lim, lim),
        }
    return params


# ----------------------------------------------------------------------------
if __name__ == "__main__":
    N = 8            # batch of latent vectors
    IN_DIM = 32      # latent dimensionality
    HIDDEN = [64, 32]
    N_GENES = 128

    key = jax.random.PRNGKey(0)
    kparam, kz = jax.random.split(key)
    params = init_zinb_decoder(kparam, IN_DIM, HIDDEN, N_GENES)
    z = jax.random.normal(kz, (N, IN_DIM), jnp.float32)

    pi, theta, mu = zinb_decoder_forward(params, z)
    jax.block_until_ready((pi, theta, mu))

    # Pure-JAX reference of the same math (eval-mode module).
    h_ref = z
    for layer in params["hidden"]:
        scale = layer["gamma"] / jnp.sqrt(layer["running_var"] + 1e-5)
        shift = layer["beta"] - layer["running_mean"] * scale
        h_ref = jnp.maximum((h_ref @ layer["w"] + layer["b"]) * scale + shift, 0.0)
    pi_ref = jax.nn.sigmoid(h_ref @ params["pi"]["w"] + params["pi"]["b"])
    theta_ref = jnp.clip(jax.nn.softplus(h_ref @ params["disp"]["w"] + params["disp"]["b"]),
                         1e-4, 1e4)
    mu_ref = jnp.clip(jnp.exp(h_ref @ params["mean"]["w"] + params["mean"]["b"]),
                      1e-5, 1e6)

    assert pi.shape == (N, N_GENES) and theta.shape == (N, N_GENES) and mu.shape == (N, N_GENES)
    assert jnp.allclose(pi, pi_ref, atol=1e-4, rtol=1e-4)
    assert jnp.allclose(theta, theta_ref, atol=1e-4, rtol=1e-4)
    assert jnp.allclose(mu, mu_ref, atol=1e-4, rtol=1e-4)

    print("KERNEL_OK")
</pallas_src>

<mosaic_0001>
module attributes {stable_mosaic.version = 11 : i64} {
  func.func @kernel(%arg0: i32, %arg1: memref<8x32xf32, #tpu.memory_space<vmem>>, %arg2: memref<32x64xf32, #tpu.memory_space<vmem>>, %arg3: memref<1x64xf32, #tpu.memory_space<vmem>>, %arg4: memref<64x32xf32, #tpu.memory_space<vmem>>, %arg5: memref<1x32xf32, #tpu.memory_space<vmem>>, %arg6: memref<32x384xf32, #tpu.memory_space<vmem>>, %arg7: memref<1x384xf32, #tpu.memory_space<vmem>>, %arg8: memref<8x128xf32, #tpu.memory_space<vmem>>, %arg9: memref<8x128xf32, #tpu.memory_space<vmem>>, %arg10: memref<8x128xf32, #tpu.memory_space<vmem>>) attributes {dimension_semantics = [#tpu.dimension_semantics<parallel>], iteration_bounds = array<i64: 1>, scalar_prefetch = 0 : i64, scratch_operands = 0 : i64, tpu.core_type = #tpu.core_type<tc>, window_params = [{transform_indices = @transform_0, window_bounds = array<i64: 8, 32>}, {pipeline_mode = #tpu.pipeline_mode<synchronous>, transform_indices = @transform_1, window_bounds = array<i64: 32, 64>}, {pipeline_mode = #tpu.pipeline_mode<synchronous>, transform_indices = @transform_2, window_bounds = array<i64: 1, 64>}, {pipeline_mode = #tpu.pipeline_mode<synchronous>, transform_indices = @transform_3, window_bounds = array<i64: 64, 32>}, {pipeline_mode = #tpu.pipeline_mode<synchronous>, transform_indices = @transform_4, window_bounds = array<i64: 1, 32>}, {pipeline_mode = #tpu.pipeline_mode<synchronous>, transform_indices = @transform_5, window_bounds = array<i64: 32, 384>}, {pipeline_mode = #tpu.pipeline_mode<synchronous>, transform_indices = @transform_6, window_bounds = array<i64: 1, 384>}, {transform_indices = @transform_7, window_bounds = array<i64: 8, 128>}, {transform_indices = @transform_8, window_bounds = array<i64: 8, 128>}, {transform_indices = @transform_9, window_bounds = array<i64: 8, 128>}]} {
    %c0 = arith.constant 0 : index
    %c0_0 = arith.constant 0 : index
    %0 = vector.load %arg1[%c0, %c0_0] : memref<8x32xf32, #tpu.memory_space<vmem>>, vector<8x32xf32>
    %c0_1 = arith.constant 0 : index
    %c0_2 = arith.constant 0 : index
    %1 = vector.load %arg2[%c0_1, %c0_2] : memref<32x64xf32, #tpu.memory_space<vmem>>, vector<32x64xf32>
    %cst = arith.constant dense<0.000000e+00> : vector<8x64xf32>
    %2 = tpu.matmul %0, %1, %cst {dimension_numbers = #tpu.dot_dimension_numbers<[1], [0], [0], [1], [0, 0, 1, 1], [], []>} : vector<8x32xf32>, vector<32x64xf32>, vector<8x64xf32> -> vector<8x64xf32>
    %c0_3 = arith.constant 0 : index
    %c0_4 = arith.constant 0 : index
    %3 = vector.load %arg3[%c0_3, %c0_4] : memref<1x64xf32, #tpu.memory_space<vmem>>, vector<1x64xf32>
    %4 = vector.broadcast %3 : vector<1x64xf32> to vector<8x64xf32>
    %5 = arith.addf %2, %4 : vector<8x64xf32>
    %cst_5 = arith.constant 0.000000e+00 : f32
    %6 = vector.broadcast %cst_5 : f32 to vector<8x64xf32>
    %7 = arith.maximumf %5, %6 : vector<8x64xf32>
    %c0_6 = arith.constant 0 : index
    %c0_7 = arith.constant 0 : index
    %8 = vector.load %arg4[%c0_6, %c0_7] : memref<64x32xf32, #tpu.memory_space<vmem>>, vector<64x32xf32>
    %cst_8 = arith.constant dense<0.000000e+00> : vector<8x32xf32>
    %9 = tpu.matmul %7, %8, %cst_8 {dimension_numbers = #tpu.dot_dimension_numbers<[1], [0], [0], [1], [0, 0, 1, 1], [], []>} : vector<8x64xf32>, vector<64x32xf32>, vector<8x32xf32> -> vector<8x32xf32>
    %c0_9 = arith.constant 0 : index
    %c0_10 = arith.constant 0 : index
    %10 = vector.load %arg5[%c0_9, %c0_10] : memref<1x32xf32, #tpu.memory_space<vmem>>, vector<1x32xf32>
    %11 = vector.broadcast %10 : vector<1x32xf32> to vector<8x32xf32>
    %12 = arith.addf %9, %11 : vector<8x32xf32>
    %cst_11 = arith.constant 0.000000e+00 : f32
    %13 = vector.broadcast %cst_11 : f32 to vector<8x32xf32>
    %14 = arith.maximumf %12, %13 : vector<8x32xf32>
    %c0_12 = arith.constant 0 : index
    %c0_13 = arith.constant 0 : index
    %15 = vector.load %arg6[%c0_12, %c0_13] : memref<32x384xf32, #tpu.memory_space<vmem>>, vector<32x384xf32>
    %cst_14 = arith.constant dense<0.000000e+00> : vector<8x384xf32>
    %16 = tpu.matmul %14, %15, %cst_14 {dimension_numbers = #tpu.dot_dimension_numbers<[1], [0], [0], [1], [0, 0, 1, 1], [], []>} : vector<8x32xf32>, vector<32x384xf32>, vector<8x384xf32> -> vector<8x384xf32>
    %c0_15 = arith.constant 0 : index
    %c0_16 = arith.constant 0 : index
    %17 = vector.load %arg7[%c0_15, %c0_16] : memref<1x384xf32, #tpu.memory_space<vmem>>, vector<1x384xf32>
    %18 = vector.broadcast %17 : vector<1x384xf32> to vector<8x384xf32>
    %19 = arith.addf %16, %18 : vector<8x384xf32>
    %20 = vector.extract_strided_slice %19 {offsets = [0, 0], sizes = [8, 128], strides = [1, 1]} : vector<8x384xf32> to vector<8x128xf32>
    %21 = vector.extract_strided_slice %19 {offsets = [0, 128], sizes = [8, 128], strides = [1, 1]} : vector<8x384xf32> to vector<8x128xf32>
    %22 = vector.extract_strided_slice %19 {offsets = [0, 256], sizes = [8, 128], strides = [1, 1]} : vector<8x384xf32> to vector<8x128xf32>
    %cst_17 = arith.constant 5.000000e-01 : f32
    %23 = vector.broadcast %cst_17 : f32 to vector<8x128xf32>
    %24 = arith.mulf %23, %20 : vector<8x128xf32>
    %25 = math.tanh %24 : vector<8x128xf32>
    %cst_18 = arith.constant 1.000000e+00 : f32
    %26 = vector.broadcast %cst_18 : f32 to vector<8x128xf32>
    %27 = arith.addf %25, %26 : vector<8x128xf32>
    %cst_19 = arith.constant 5.000000e-01 : f32
    %28 = vector.broadcast %cst_19 : f32 to vector<8x128xf32>
    %29 = arith.mulf %28, %27 : vector<8x128xf32>
    %c0_20 = arith.constant 0 : index
    %c0_21 = arith.constant 0 : index
    %30 = vector.load %arg8[%c0_20, %c0_21] : memref<8x128xf32, #tpu.memory_space<vmem>>, vector<8x128xf32>
    tpu.vector_store %arg8[%c0_20, %c0_21], %29 {strides = array<i32>} : memref<8x128xf32, #tpu.memory_space<vmem>>, vector<8x128xf32>,
    %cst_22 = arith.constant 2.000000e+01 : f32
    %31 = vector.broadcast %cst_22 : f32 to vector<8x128xf32>
    %32 = arith.cmpf ogt, %21, %31 : vector<8x128xf32>
    %cst_23 = arith.constant 2.000000e+01 : f32
    %33 = vector.broadcast %cst_23 : f32 to vector<8x128xf32>
    %34 = arith.minimumf %21, %33 : vector<8x128xf32>
    %35 = math.exp %34 : vector<8x128xf32>
    %36 = math.log1p %35 : vector<8x128xf32>
    %37 = arith.select %32, %21, %36 : vector<8x128xi1>, vector<8x128xf32>
    %cst_24 = arith.constant 9.99999974E-5 : f32
    %cst_25 = arith.constant 1.000000e+04 : f32
    %38 = vector.broadcast %cst_24 : f32 to vector<8x128xf32>
    %39 = arith.maximumf %38, %37 : vector<8x128xf32>
    %40 = vector.broadcast %cst_25 : f32 to vector<8x128xf32>
    %41 = arith.minimumf %40, %39 : vector<8x128xf32>
    %c0_26 = arith.constant 0 : index
    %c0_27 = arith.constant 0 : index
    %42 = vector.load %arg9[%c0_26, %c0_27] : memref<8x128xf32, #tpu.memory_space<vmem>>, vector<8x128xf32>
    tpu.vector_store %arg9[%c0_26, %c0_27], %41 {strides = array<i32>} : memref<8x128xf32, #tpu.memory_space<vmem>>, vector<8x128xf32>,
    %43 = math.exp %22 : vector<8x128xf32>
    %cst_28 = arith.constant 9.99999974E-6 : f32
    %cst_29 = arith.constant 1.000000e+06 : f32
    %44 = vector.broadcast %cst_28 : f32 to vector<8x128xf32>
    %45 = arith.maximumf %44, %43 : vector<8x128xf32>
    %46 = vector.broadcast %cst_29 : f32 to vector<8x128xf32>
    %47 = arith.minimumf %46, %45 : vector<8x128xf32>
    %c0_30 = arith.constant 0 : index
    %c0_31 = arith.constant 0 : index
    %48 = vector.load %arg10[%c0_30, %c0_31] : memref<8x128xf32, #tpu.memory_space<vmem>>, vector<8x128xf32>
    tpu.vector_store %arg10[%c0_30, %c0_31], %47 {strides = array<i32>} : memref<8x128xf32, #tpu.memory_space<vmem>>, vector<8x128xf32>,
    return
  }
  func.func @transform_0(%arg0: i32) -> (i32, i32) {
    %c0_i32 = arith.constant 0 : i32
    %c0_i32_0 = arith.constant 0 : i32
    return %arg0, %c0_i32 : i32, i32
  }
  func.func @transform_1(%arg0: i32) -> (i32, i32) {
    %c0_i32 = arith.constant 0 : i32
    %c0_i32_0 = arith.constant 0 : i32
    %c0_i32_1 = arith.constant 0 : i32
    return %c0_i32, %c0_i32_0 : i32, i32
  }
  func.func @transform_2(%arg0: i32) -> (i32, i32) {
    %c0_i32 = arith.constant 0 : i32
    %c0_i32_0 = arith.constant 0 : i32
    %c0_i32_1 = arith.constant 0 : i32
    return %c0_i32, %c0_i32_0 : i32, i32
  }
  func.func @transform_3(%arg0: i32) -> (i32, i32) {
    %c0_i32 = arith.constant 0 : i32
    %c0_i32_0 = arith.constant 0 : i32
    %c0_i32_1 = arith.constant 0 : i32
    return %c0_i32, %c0_i32_0 : i32, i32
  }
  func.func @transform_4(%arg0: i32) -> (i32, i32) {
    %c0_i32 = arith.constant 0 : i32
    %c0_i32_0 = arith.constant 0 : i32
    %c0_i32_1 = arith.constant 0 : i32
    return %c0_i32, %c0_i32_0 : i32, i32
  }
  func.func @transform_5(%arg0: i32) -> (i32, i32) {
    %c0_i32 = arith.constant 0 : i32
    %c0_i32_0 = arith.constant 0 : i32
    %c0_i32_1 = arith.constant 0 : i32
    return %c0_i32, %c0_i32_0 : i32, i32
  }
  func.func @transform_6(%arg0: i32) -> (i32, i32) {
    %c0_i32 = arith.constant 0 : i32
    %c0_i32_0 = arith.constant 0 : i32
    %c0_i32_1 = arith.constant 0 : i32
    return %c0_i32, %c0_i32_0 : i32, i32
  }
  func.func @transform_7(%arg0: i32) -> (i32, i32) {
    %c0_i32 = arith.constant 0 : i32
    %c0_i32_0 = arith.constant 0 : i32
    return %arg0, %c0_i32 : i32, i32
  }
  func.func @transform_8(%arg0: i32) -> (i32, i32) {
    %c0_i32 = arith.constant 0 : i32
    %c0_i32_0 = arith.constant 0 : i32
    return %arg0, %c0_i32 : i32, i32
  }
  func.func @transform_9(%arg0: i32) -> (i32, i32) {
    %c0_i32 = arith.constant 0 : i32
    %c0_i32_0 = arith.constant 0 : i32
    return %arg0, %c0_i32 : i32, i32
  }
}

</mosaic_0001>

<llo_original>
// kernel: zinb_decoder_forward.1
$region0: #{zinb_decoder_forward.1}
  #allocation0 [shape = 'u32[]', space=smem, size = 0x4, offset = 0x4, fixed_abs, tag = 'smem constant byte address 0x4 - core index']
  #allocation1 [shape = 'u32[144,128]{1,0:T(1,128)}', space=vmem, size = 0x12000, scoped, tag = 'internal scratch']
  %s0 = inlined_call_operand.vmem [shape: f32[8,32], index: 0, kind: input, shape index: {}]
  %s1 = inlined_call_operand.vmem [shape: f32[32,64], index: 1, kind: input, shape index: {}]
  %s2 = inlined_call_operand.vmem [shape: f32[1,64], index: 2, kind: input, shape index: {}]
  %s3 = inlined_call_operand.vmem [shape: f32[64,32], index: 3, kind: input, shape index: {}]
  %s4 = inlined_call_operand.vmem [shape: f32[1,32], index: 4, kind: input, shape index: {}]
  %s5 = inlined_call_operand.vmem [shape: f32[32,384], index: 5, kind: input, shape index: {}]
  %s6 = inlined_call_operand.vmem [shape: f32[1,384], index: 6, kind: input, shape index: {}]
  %s7 = inlined_call_operand.hbm [shape: f32[8,128], index: 7, kind: output, shape index: {0}]
  %s8 = inlined_call_operand.hbm [shape: f32[8,128], index: 8, kind: output, shape index: {1}]
  %s9 = inlined_call_operand.hbm [shape: f32[8,128], index: 9, kind: output, shape index: {2}]
  %10 = xla_tuple %s7, %s8, %s9
  %s11 = sld [smem:[#allocation0]]
  $region54: #{zinb_decoder_forward.1} parent=0
    _
  %s13 = ssub.s32 1, %s11
  %s14 = scalar_select 0, %s13, %s11
  $region1: #{zinb_decoder_forward.1} parent=0
    #allocation2 [shape = 'u8[4096]{0}', space=vmem, size = 0x1000, scoped, tag = 'output window, operand 0, single buffered']
    #allocation3 [shape = 's32[1]{0}', space=sflag, size = 0x4, scoped, tag = 'scoped memory for zinb_decoder_forward.1']
    #allocation4 [shape = 'u8[4096]{0}', space=vmem, size = 0x1000, scoped, tag = 'output window, operand 1, single buffered']
    #allocation5 [shape = 's32[1]{0}', space=sflag, size = 0x4, scoped, tag = 'scoped memory for zinb_decoder_forward.1']
    #allocation6 [shape = 'u8[4096]{0}', space=vmem, size = 0x1000, scoped, tag = 'output window, operand 2, single buffered']
    %15 = vsyncpa [#allocation3], 0
    %16 = vsyncpa [#allocation5], 0
    // Predicated region
    $region2: #{zinb_decoder_forward.1} parent=1 // pred_check
      _
    $region3: #{zinb_decoder_forward.1} parent=1 // pred_check_branch
      %18 = sbr.rel (0) target = $region5
    $region4: #{zinb_decoder_forward.1} parent=1 // pred_region
      _
    $region5: #{zinb_decoder_forward.1} parent=1 // pred_fallthru
      _
    // Predicated region
    $region6: #{zinb_decoder_forward.1} parent=1 // pred_check
      _
    $region7: #{zinb_decoder_forward.1} parent=1 // pred_check_branch
      %20 = sbr.rel (0) target = $region9
    $region8: #{zinb_decoder_forward.1} parent=1 // pred_region
      _
    $region9: #{zinb_decoder_forward.1} parent=1 // pred_fallthru
      _
    // Predicated region
    $region10: #{zinb_decoder_forward.1} parent=1 // pred_check
      _
    $region11: #{zinb_decoder_forward.1} parent=1 // pred_check_branch
      %22 = sbr.rel (0) target = $region13
    $region12: #{zinb_decoder_forward.1} parent=1 // pred_region
      _
    $region13: #{zinb_decoder_forward.1} parent=1 // pred_fallthru
      _
    // Predicated region
    $region14: #{zinb_decoder_forward.1} parent=1 // pred_check
      _
    $region15: #{zinb_decoder_forward.1} parent=1 // pred_check_branch
      %24 = sbr.rel (0) target = $region17
    $region16: #{zinb_decoder_forward.1} parent=1 // pred_region
      _
    $region17: #{zinb_decoder_forward.1} parent=1 // pred_fallthru
      _
    // Predicated region
    $region18: #{zinb_decoder_forward.1} parent=1 // pred_check
      _
    $region19: #{zinb_decoder_forward.1} parent=1 // pred_check_branch
      %26 = sbr.rel (0) target = $region21
    $region20: #{zinb_decoder_forward.1} parent=1 // pred_region
      _
    $region21: #{zinb_decoder_forward.1} parent=1 // pred_fallthru
      _
    // Predicated region
    $region22: #{zinb_decoder_forward.1} parent=1 // pred_check
      _
    $region23: #{zinb_decoder_forward.1} parent=1 // pred_check_branch
      %28 = sbr.rel (0) target = $region25
    $region24: #{zinb_decoder_forward.1} parent=1 // pred_region
      _
    $region25: #{zinb_decoder_forward.1} parent=1 // pred_fallthru
      _
    // Predicated region
    $region26: #{zinb_decoder_forward.1} parent=1 // pred_check
      _
    $region27: #{zinb_decoder_forward.1} parent=1 // pred_check_branch
      %30 = sbr.rel (0) target = $region29
    $region28: #{zinb_decoder_forward.1} parent=1 // pred_region
      _
    $region29: #{zinb_decoder_forward.1} parent=1 // pred_fallthru
      _
    %v31 = vld [vmem:[%s0] sm:$0xff]
    %v32 = vld [vmem:[%s1] sm:$0xff]
    %v33 = vld [vmem:[%s1 + $0x8] sm:$0xff]
    %v34 = vld [vmem:[%s1 + $0x10] sm:$0xff]
    %v35 = vld [vmem:[%s1 + $0x18] sm:$0xff]
    %v36 = vld [vmem:[%s2] sm:$0x1]
    %v38 = vlaneseq
    %v39 = vshrl.u32 %v38, 7
    %v40 = vsub.s32 0, %v39
    %v41 = vrot.slane %v36, %v40
    %vm43 = vcmask 261120
    %v45 = vsel %vm43, %v31, 0
    %47 = vmatprep.subr.mxu0 0.0
    %48 = vmatpush1.msra.mxu0 0.0
    %49 = vmatprep.subr.mxu0 0.0
    %50 = vmatpush1.msra.mxu0 0.0
    %51 = vmatprep.subr.mxu0 0.0
    %52 = vmatpush1.msra.mxu0 0.0
    %53 = vmatprep.subr.mxu0 0.0
    %54 = vmatpush1.msra.mxu0 0.0
    %55 = vmatprep.subr.mxu0 0.0
    %56 = vmatpush1.msra.mxu0 0.0
    %57 = vmatprep.subr.mxu0 0.0
    %58 = vmatpush1.msra.mxu0 0.0
    %59 = vmatprep.subr.mxu0 0.0
    %60 = vmatpush1.msra.mxu0 0.0
    %61 = vmatprep.subr.mxu0 0.0
    %62 = vmatpush1.msra.mxu0 0.0
    %63 = vmatprep.subr.mxu0 0.0
    %64 = vmatpush1.msra.mxu0 0.0
    %65 = vmatprep.subr.mxu0 0.0
    %66 = vmatpush1.msra.mxu0 0.0
    %67 = vmatprep.subr.mxu0 0.0
    %68 = vmatpush1.msra.mxu0 0.0
    %69 = vmatprep.subr.mxu0 0.0
    %70 = vmatpush1.msra.mxu0 0.0
    %71 = vmatprep.subr.mxu0 0.0
    %72 = vmatpush1.msra.mxu0 %v35
    %73 = vmatprep.subr.mxu0 0.0
    %74 = vmatpush1.msra.mxu0 %v34
    %75 = vmatprep.subr.mxu0 0.0
    %76 = vmatpush1.msra.mxu0 %v33
    %77 = vmatprep.subr.mxu0 0.0
    %78 = vmatpush1.msra.mxu0 %v32
    %79 = vmatprep.subr.mxu0 0.0
    %80 = vmatpush2.msra.mxu0 0.0
    %81 = vmatprep.subr.mxu0 0.0
    %82 = vmatpush2.msra.mxu0 0.0
    %83 = vmatprep.subr.mxu0 0.0
    %84 = vmatpush2.msra.mxu0 0.0
    %85 = vmatprep.subr.mxu0 0.0
    %86 = vmatpush2.msra.mxu0 0.0
    %87 = vmatprep.subr.mxu0 0.0
    %88 = vmatpush2.msra.mxu0 0.0
    %89 = vmatprep.subr.mxu0 0.0
    %90 = vmatpush2.msra.mxu0 0.0
    %91 = vmatprep.subr.mxu0 0.0
    %92 = vmatpush2.msra.mxu0 0.0
    %93 = vmatprep.subr.mxu0 0.0
    %94 = vmatpush2.msra.mxu0 0.0
    %95 = vmatprep.subr.mxu0 0.0
    %96 = vmatpush2.msra.mxu0 0.0
    %97 = vmatprep.subr.mxu0 0.0
    %98 = vmatpush2.msra.mxu0 0.0
    %99 = vmatprep.subr.mxu0 0.0
    %100 = vmatpush2.msra.mxu0 0.0
    %101 = vmatprep.subr.mxu0 0.0
    %102 = vmatpush2.msra.mxu0 0.0
    %103 = vmatprep.subr.mxu0 0.0
    %104 = vmatpush2.msra.mxu0 0.0
    %105 = vmatprep.subr.mxu0 0.0
    %106 = vmatpush2.msra.mxu0 0.0
    %107 = vmatprep.subr.mxu0 0.0
    %108 = vmatpush2.msra.mxu0 0.0
    %109 = vmatprep.subr.mxu0 0.0
    %110 = vmatpush2.msra.mxu0 0.0
    %111 = vmatprep.mubr.f32.mxu0 0.0
    %112 = vmatmul.mubr.f32.gmra.mxu0 %v45
    %v113 = vpop.f32.mrf.mxu0
    %v114 = vadd.f32 %v41, %v113
    %v115 = vpop.f32.mrf.mxu0
    %116 = vdwg.mxu0
    %v117 = vmax.f32 %v114, 0.0
    %v118 = vld [vmem:[%s3] sm:$0xff]
    %v119 = vld [vmem:[%s3 + $0x8] sm:$0xff]
    %v120 = vld [vmem:[%s3 + $0x10] sm:$0xff]
    %v121 = vld [vmem:[%s3 + $0x18] sm:$0xff]
    %v122 = vld [vmem:[%s3 + $0x20] sm:$0xff]
    %v123 = vld [vmem:[%s3 + $0x28] sm:$0xff]
    %v124 = vld [vmem:[%s3 + $0x30] sm:$0xff]
    %v125 = vld [vmem:[%s3 + $0x38] sm:$0xff]
    %v126 = vld [vmem:[%s4] sm:$0x1]
    %v128 = vlaneseq
    %v129 = vshrl.u32 %v128, 7
    %v130 = vsub.s32 0, %v129
    %v131 = vrot.slane %v126, %v130
    %vm133 = vcmask 523264
    %v135 = vsel %vm133, %v117, 0
    %137 = vmatprep.subr.mxu0 0.0
    %138 = vmatpush1.msra.mxu0 0.0
    %139 = vmatprep.subr.mxu0 0.0
    %140 = vmatpush1.msra.mxu0 0.0
    %141 = vmatprep.subr.mxu0 0.0
    %142 = vmatpush1.msra.mxu0 0.0
    %143 = vmatprep.subr.mxu0 0.0
    %144 = vmatpush1.msra.mxu0 0.0
    %145 = vmatprep.subr.mxu0 0.0
    %146 = vmatpush1.msra.mxu0 0.0
    %147 = vmatprep.subr.mxu0 0.0
    %148 = vmatpush1.msra.mxu0 0.0
    %149 = vmatprep.subr.mxu0 0.0
    %150 = vmatpush1.msra.mxu0 0.0
    %151 = vmatprep.subr.mxu0 0.0
    %152 = vmatpush1.msra.mxu0 0.0
    %153 = vmatprep.subr.mxu0 0.0
    %154 = vmatpush1.msra.mxu0 %v125
    %155 = vmatprep.subr.mxu0 0.0
    %156 = vmatpush1.msra.mxu0 %v124
    %157 = vmatprep.subr.mxu0 0.0
    %158 = vmatpush1.msra.mxu0 %v123
    %159 = vmatprep.subr.mxu0 0.0
    %160 = vmatpush1.msra.mxu0 %v122
    %161 = vmatprep.subr.mxu0 0.0
    %162 = vmatpush1.msra.mxu0 %v121
    %163 = vmatprep.subr.mxu0 0.0
    %164 = vmatpush1.msra.mxu0 %v120
    %165 = vmatprep.subr.mxu0 0.0
    %166 = vmatpush1.msra.mxu0 %v119
    %167 = vmatprep.subr.mxu0 0.0
    %168 = vmatpush1.msra.mxu0 %v118
    %169 = vmatprep.subr.mxu0 0.0
    %170 = vmatpush2.msra.mxu0 0.0
    %171 = vmatprep.subr.mxu0 0.0
    %172 = vmatpush2.msra.mxu0 0.0
    %173 = vmatprep.subr.mxu0 0.0
    %174 = vmatpush2.msra.mxu0 0.0
    %175 = vmatprep.subr.mxu0 0.0
    %176 = vmatpush2.msra.mxu0 0.0
    %177 = vmatprep.subr.mxu0 0.0
    %178 = vmatpush2.msra.mxu0 0.0
    %179 = vmatprep.subr.mxu0 0.0
    %180 = vmatpush2.msra.mxu0 0.0
    %181 = vmatprep.subr.mxu0 0.0
    %182 = vmatpush2.msra.mxu0 0.0
    %183 = vmatprep.subr.mxu0 0.0
    %184 = vmatpush2.msra.mxu0 0.0
    %185 = vmatprep.subr.mxu0 0.0
    %186 = vmatpush2.msra.mxu0 0.0
    %187 = vmatprep.subr.mxu0 0.0
    %188 = vmatpush2.msra.mxu0 0.0
    %189 = vmatprep.subr.mxu0 0.0
    %190 = vmatpush2.msra.mxu0 0.0
    %191 = vmatprep.subr.mxu0 0.0
    %192 = vmatpush2.msra.mxu0 0.0
    %193 = vmatprep.subr.mxu0 0.0
    %194 = vmatpush2.msra.mxu0 0.0
    %195 = vmatprep.subr.mxu0 0.0
    %196 = vmatpush2.msra.mxu0 0.0
    %197 = vmatprep.subr.mxu0 0.0
    %198 = vmatpush2.msra.mxu0 0.0
    %199 = vmatprep.subr.mxu0 0.0
    %200 = vmatpush2.msra.mxu0 0.0
    %201 = vmatprep.mubr.f32.mxu0 0.0
    %202 = vmatmul.mubr.f32.gmra.mxu0 %v135
    %v203 = vpop.f32.mrf.mxu0
    %v204 = vadd.f32 %v131, %v203
    %v205 = vpop.f32.mrf.mxu0
    %206 = vdwg.mxu0
    %v207 = vmax.f32 %v204, 0.0
    %v208 = vld [vmem:[%s5] sm:$0xff]
    %v209 = vld [vmem:[%s5 + $0x8] sm:$0xff]
    %v210 = vld [vmem:[%s5 + $0x10] sm:$0xff]
    %v211 = vld [vmem:[%s5 + $0x18] sm:$0xff]
    %v212 = vld [vmem:[%s5 + $0x20] sm:$0xff]
    %v213 = vld [vmem:[%s5 + $0x28] sm:$0xff]
    %v214 = vld [vmem:[%s5 + $0x30] sm:$0xff]
    %v215 = vld [vmem:[%s5 + $0x38] sm:$0xff]
    %v216 = vld [vmem:[%s5 + $0x40] sm:$0xff]
    %v217 = vld [vmem:[%s5 + $0x48] sm:$0xff]
    %v218 = vld [vmem:[%s5 + $0x50] sm:$0xff]
    %v219 = vld [vmem:[%s5 + $0x58] sm:$0xff]
    %v220 = vld [vmem:[%s6] sm:$0x7]
    %v222 = vlaneseq
    %v223 = vshrl.u32 %v222, 7
    %v224 = vsub.s32 0, %v223
    %v225 = vrot.slane %v220, %v224
    %v226 = vlaneseq
    %v227 = vshrl.u32 %v226, 7
    %v228 = vsub.s32 1, %v227
    %v229 = vrot.slane %v220, %v228
    %v230 = vlaneseq
    %v231 = vshrl.u32 %v230, 7
    %v232 = vsub.s32 2, %v231
    %v233 = vrot.slane %v220, %v232
    %v238 = vsel %vm43, %v207, 0
    %240 = vmatprep.subr.mxu0 0.0
    %241 = vmatpush1.msra.mxu0 0.0
    %242 = vmatprep.subr.mxu0 0.0
    %243 = vmatpush1.msra.mxu0 0.0
    %244 = vmatprep.subr.mxu0 0.0
    %245 = vmatpush1.msra.mxu0 0.0
    %246 = vmatprep.subr.mxu0 0.0
    %247 = vmatpush1.msra.mxu0 0.0
    %248 = vmatprep.subr.mxu0 0.0
    %249 = vmatpush1.msra.mxu0 0.0
    %250 = vmatprep.subr.mxu0 0.0
    %251 = vmatpush1.msra.mxu0 0.0
    %252 = vmatprep.subr.mxu0 0.0
    %253 = vmatpush1.msra.mxu0 0.0
    %254 = vmatprep.subr.mxu0 0.0
    %255 = vmatpush1.msra.mxu0 0.0
    %256 = vmatprep.subr.mxu0 0.0
    %257 = vmatpush1.msra.mxu0 0.0
    %258 = vmatprep.subr.mxu0 0.0
    %259 = vmatpush1.msra.mxu0 0.0
    %260 = vmatprep.subr.mxu0 0.0
    %261 = vmatpush1.msra.mxu0 0.0
    %262 = vmatprep.subr.mxu0 0.0
    %263 = vmatpush1.msra.mxu0 0.0
    %264 = vmatprep.subr.mxu0 %v218
    %265 = vmatpush1.msra.mxu0 %v217
    %266 = vmatprep.subr.mxu0 %v215
    %267 = vmatpush1.msra.mxu0 %v214
    %268 = vmatprep.subr.mxu0 %v212
    %269 = vmatpush1.msra.mxu0 %v211
    %270 = vmatprep.subr.mxu0 %v209
    %271 = vmatpush1.msra.mxu0 %v208
    %272 = vmatprep.subr.mxu0 0.0
    %273 = vmatpush2.msra.mxu0 0.0
    %274 = vmatprep.subr.mxu0 0.0
    %275 = vmatpush2.msra.mxu0 0.0
    %276 = vmatprep.subr.mxu0 0.0
    %277 = vmatpush2.msra.mxu0 0.0
    %278 = vmatprep.subr.mxu0 0.0
    %279 = vmatpush2.msra.mxu0 0.0
    %280 = vmatprep.subr.mxu0 0.0
    %281 = vmatpush2.msra.mxu0 0.0
    %282 = vmatprep.subr.mxu0 0.0
    %283 = vmatpush2.msra.mxu0 0.0
    %284 = vmatprep.subr.mxu0 0.0
    %285 = vmatpush2.msra.mxu0 0.0
    %286 = vmatprep.subr.mxu0 0.0
    %287 = vmatpush2.msra.mxu0 0.0
    %288 = vmatprep.subr.mxu0 0.0
    %289 = vmatpush2.msra.mxu0 0.0
    %290 = vmatprep.subr.mxu0 0.0
    %291 = vmatpush2.msra.mxu0 0.0
    %292 = vmatprep.subr.mxu0 0.0
    %293 = vmatpush2.msra.mxu0 0.0
    %294 = vmatprep.subr.mxu0 0.0
    %295 = vmatpush2.msra.mxu0 0.0
    %296 = vmatprep.subr.mxu0 0.0
    %297 = vmatpush2.msra.mxu0 0.0
    %298 = vmatprep.subr.mxu0 0.0
    %299 = vmatpush2.msra.mxu0 0.0
    %300 = vmatprep.subr.mxu0 0.0
    %301 = vmatpush2.msra.mxu0 0.0
    %302 = vmatprep.subr.mxu0 0.0
    %303 = vmatpush2.msra.mxu0 0.0
    %304 = vmatprep.mubr.f32.mxu0 0.0
    %305 = vmatmul.mubr.f32.gmra.mxu0 %v238
    %v306 = vpop.f32.mrf.mxu0
    %v307 = vadd.f32 %v225, %v306
    %v308 = vpop.f32.mrf.mxu0
    %v309 = vadd.f32 %v229, %v308
    %310 = vdwg.mxu0
    %311 = vmatprep.subr.mxu0 0.0
    %312 = vmatpush1.msra.mxu0 0.0
    %313 = vmatprep.subr.mxu0 0.0
    %314 = vmatpush1.msra.mxu0 0.0
    %315 = vmatprep.subr.mxu0 0.0
    %316 = vmatpush1.msra.mxu0 0.0
    %317 = vmatprep.subr.mxu0 0.0
    %318 = vmatpush1.msra.mxu0 0.0
    %319 = vmatprep.subr.mxu0 0.0
    %320 = vmatpush1.msra.mxu0 0.0
    %321 = vmatprep.subr.mxu0 0.0
    %322 = vmatpush1.msra.mxu0 0.0
    %323 = vmatprep.subr.mxu0 0.0
    %324 = vmatpush1.msra.mxu0 0.0
    %325 = vmatprep.subr.mxu0 0.0
    %326 = vmatpush1.msra.mxu0 0.0
    %327 = vmatprep.subr.mxu0 0.0
    %328 = vmatpush1.msra.mxu0 0.0
    %329 = vmatprep.subr.mxu0 0.0
    %330 = vmatpush1.msra.mxu0 0.0
    %331 = vmatprep.subr.mxu0 0.0
    %332 = vmatpush1.msra.mxu0 0.0
    %333 = vmatprep.subr.mxu0 0.0
    %334 = vmatpush1.msra.mxu0 0.0
    %335 = vmatprep.subr.mxu0 0.0
    %336 = vmatpush1.msra.mxu0 %v219
    %337 = vmatprep.subr.mxu0 0.0
    %338 = vmatpush1.msra.mxu0 %v216
    %339 = vmatprep.subr.mxu0 0.0
    %340 = vmatpush1.msra.mxu0 %v213
    %341 = vmatprep.subr.mxu0 0.0
    %342 = vmatpush1.msra.mxu0 %v210
    %343 = vmatprep.subr.mxu0 0.0
    %344 = vmatpush2.msra.mxu0 0.0
    %345 = vmatprep.subr.mxu0 0.0
    %346 = vmatpush2.msra.mxu0 0.0
    %347 = vmatprep.subr.mxu0 0.0
    %348 = vmatpush2.msra.mxu0 0.0
    %349 = vmatprep.subr.mxu0 0.0
    %350 = vmatpush2.msra.mxu0 0.0
    %351 = vmatprep.subr.mxu0 0.0
    %352 = vmatpush2.msra.mxu0 0.0
    %353 = vmatprep.subr.mxu0 0.0
    %354 = vmatpush2.msra.mxu0 0.0
    %355 = vmatprep.subr.mxu0 0.0
    %356 = vmatpush2.msra.mxu0 0.0
    %357 = vmatprep.subr.mxu0 0.0
    %358 = vmatpush2.msra.mxu0 0.0
    %359 = vmatprep.subr.mxu0 0.0
    %360 = vmatpush2.msra.mxu0 0.0
    %361 = vmatprep.subr.mxu0 0.0
    %362 = vmatpush2.msra.mxu0 0.0
    %363 = vmatprep.subr.mxu0 0.0
    %364 = vmatpush2.msra.mxu0 0.0
    %365 = vmatprep.subr.mxu0 0.0
    %366 = vmatpush2.msra.mxu0 0.0
    %367 = vmatprep.subr.mxu0 0.0
    %368 = vmatpush2.msra.mxu0 0.0
    %369 = vmatprep.subr.mxu0 0.0
    %370 = vmatpush2.msra.mxu0 0.0
    %371 = vmatprep.subr.mxu0 0.0
    %372 = vmatpush2.msra.mxu0 0.0
    %373 = vmatprep.subr.mxu0 0.0
    %374 = vmatpush2.msra.mxu0 0.0
    %375 = vmatprep.mubr.f32.mxu0 0.0
    %376 = vmatmul.mubr.f32.gmra.mxu0 %v238
    %v377 = vpop.f32.mrf.mxu0
    %v378 = vadd.f32 %v233, %v377
    %v379 = vpop.f32.mrf.mxu0
    %380 = vdwg.mxu0
    %v381 = vmul.f32 %v307, 0.5
    %v382 = vtanh.pop %v381
    %v383 = vadd.f32 %v382, 1.0
    %v384 = vmul.f32 %v383, 0.5
    %385 = vst [vmem:[#allocation2] sm:$0xff] %v384
    %vm386 = vcmp.gt.f32.partialorder %v309, 20.0
    %v387 = vmin.f32 %v309, 20.0
    %v388 = vmul.f32 %v387, 1.442695
    %v389 = vpow.pop %v388
    %v390 = vadd.f32 %v389, 1.0
    %v391 = vlog2.pop %v390
    %v392 = vmul.f32 %v391, 0.6931472
    %v393 = vmul.f32 -0.5, %v389
    %v394 = vadd.f32 %v393, 1.0
    %v395 = vmul.f32 %v394, %v389
    %v396 = vand.u32 2147483647, %v389
    %vm397 = vcmp.lt.f32.partialorder %v396, 0.0004427343
    %v398 = vsel %vm397, %v395, %v392
    %v399 = vsel %vm386, %v309, %v398
    %v400 = vmax.f32 %v399, 0.0001
    %v401 = vmin.f32 %v400, 10000.0
    %402 = vst [vmem:[#allocation4] sm:$0xff] %v401
    %v403 = vmul.f32 %v378, 1.442695
    %v404 = vpow.pop %v403
    %v405 = vmax.f32 %v404, 1e-05
    %v406 = vmin.f32 %v405, 1000000.0
    %407 = vst [vmem:[#allocation6] sm:$0xff] %v406
    // Predicated region
    $region30: #{zinb_decoder_forward.1} parent=1 // pred_check
      _
    $region31: #{zinb_decoder_forward.1} parent=1 // pred_check_branch
      %409 = sbr.rel (0) target = $region33
    $region32: #{zinb_decoder_forward.1} parent=1 // pred_region
      %s411 = ssub.s32 128, 128
      %412 = vsyncadd [#allocation3], %s411
      %s414 = sshll.u32 [#allocation2], 4
      %s415 = int_to_ptr.vmem [resolvable:$true] %s414
      %417 = dma.vmem_to_hbm [thread:$0]  %s415, 128, %s7, [#allocation3]
    $region33: #{zinb_decoder_forward.1} parent=1 // pred_fallthru
      _
    // Predicated region
    $region34: #{zinb_decoder_forward.1} parent=1 // pred_check
      _
    $region35: #{zinb_decoder_forward.1} parent=1 // pred_check_branch
      %419 = sbr.rel (0) target = $region37
    $region36: #{zinb_decoder_forward.1} parent=1 // pred_region
      %s421 = ssub.s32 128, 128
      %422 = vsyncadd [#allocation5], %s421
      %s424 = sshll.u32 [#allocation4], 4
      %s425 = int_to_ptr.vmem [resolvable:$true] %s424
      %427 = dma.vmem_to_hbm [thread:$0]  %s425, 128, %s8, [#allocation5]
    $region37: #{zinb_decoder_forward.1} parent=1 // pred_fallthru
      _
    // Predicated region
    $region38: #{zinb_decoder_forward.1} parent=1 // pred_check
      _
    $region39: #{zinb_decoder_forward.1} parent=1 // pred_check_branch
      %429 = sbr.rel (0) target = $region41
    $region40: #{zinb_decoder_forward.1} parent=1 // pred_region
      %s431 = ssub.s32 128, 128
      %432 = vsyncadd [#allocation5], %s431
      %s434 = sshll.u32 [#allocation6], 4
      %s435 = int_to_ptr.vmem [resolvable:$true] %s434
      %437 = dma.vmem_to_hbm [thread:$0]  %s435, 128, %s9, [#allocation5]
    $region41: #{zinb_decoder_forward.1} parent=1 // pred_fallthru
      _
    // Predicated region
    $region42: #{zinb_decoder_forward.1} parent=1 // pred_check
      _
    $region43: #{zinb_decoder_forward.1} parent=1 // pred_check_branch
      %439 = sbr.rel (0) target = $region45
    $region44: #{zinb_decoder_forward.1} parent=1 // pred_region
      %440 = dma.done [#allocation3], 128
    $region45: #{zinb_decoder_forward.1} parent=1 // pred_fallthru
      _
    // Predicated region
    $region46: #{zinb_decoder_forward.1} parent=1 // pred_check
      _
    $region47: #{zinb_decoder_forward.1} parent=1 // pred_check_branch
      %442 = sbr.rel (0) target = $region49
    $region48: #{zinb_decoder_forward.1} parent=1 // pred_region
      %443 = dma.done [#allocation5], 128
    $region49: #{zinb_decoder_forward.1} parent=1 // pred_fallthru
      _
    // Predicated region
    $region50: #{zinb_decoder_forward.1} parent=1 // pred_check
      _
    $region51: #{zinb_decoder_forward.1} parent=1 // pred_check_branch
      %445 = sbr.rel (0) target = $region53
    $region52: #{zinb_decoder_forward.1} parent=1 // pred_region
      %446 = dma.done [#allocation5], 128
    $region53: #{zinb_decoder_forward.1} parent=1 // pred_fallthru
      _
    %447 = vsyncpa [#allocation3], 1
    %448 = vsyncpa [#allocation5], 1

</llo_original>
